<compile_context>
chip_gen: v7x
topology: tpu7x:2x2x1
jax: 0.10.0
libtpu: 0.0.40
codegen_flags: <defaults>
</compile_context>

<pallas_src>
import functools
import math

import jax
import jax.numpy as jnp
import numpy as np
from jax.experimental import pallas as pl
from jax.experimental.pallas import tpu as pltpu

_INV_SQRT2 = 1.0 / math.sqrt(2.0)


def _round_up(x, m):
    return ((x + m - 1) // m) * m


def _vmem_budget_bytes():
    """Physical VMEM minus headroom for compiler scratch (gen-aware)."""
    try:
        cap = int(pltpu.get_tpu_info().vmem_capacity_bytes)
    except Exception:  # conservative fallback (v7x per-TensorCore size)
        cap = 64 << 20
    return max(cap - (16 << 20), 16 << 20)   # ~48 MiB on v7x, ~112 MiB on v5e/v6e


# --------------------------------------------------------------------------
# Fused single-pass kernel: SE (pool + FCs + gate) + 1x1 conv + BN + GELU.
# Block: (B_blk, C_in, HWp) in, (B_blk, C_out, HWp) out.
# --------------------------------------------------------------------------
def _fused_kernel(inv_hw, x_ref, w1_ref, b1_ref, w2_ref, b2_ref,
                  cwf_ref, bn_shift_ref, o_ref):
    b_blk = x_ref.shape[0]
    xf = x_ref[...].astype(jnp.float32)                         # (B_blk, C_in, HWp)

    # ---- SE squeeze: average pool over spatial lanes (pad lanes are zero,
    #      so the sum is exact; divide by the true HW) ----
    pooled = jnp.sum(xf, axis=-1) * inv_hw                      # (B_blk, C_in)

    # ---- SE excitation on the VPU/XLU: Cr is tiny, keep the MXU issue slot
    #      free for the main conv matmul ----
    h = jnp.sum(pooled[:, None, :] * w1_ref[...][None, :, :], axis=-1) + b1_ref[...]
    h = jnp.maximum(h, 0.0)                                     # (B_blk, Cr)
    s = jnp.sum(h[:, None, :] * w2_ref[...][None, :, :], axis=-1) + b2_ref[...]
    s = jax.nn.sigmoid(s)                                       # (B_blk, C_in)

    bn_shift = bn_shift_ref[...]                                # (C_out, 1)
    for i in range(b_blk):                                      # static, small
        x_se = xf[i] * s[i][:, None]                            # (C_in, HWp)
        # 1x1 conv with BN scale folded into the weight (MXU).
        y = jnp.dot(cwf_ref[...], x_se, preferred_element_type=jnp.float32)
        y = y + bn_shift
        y = 0.5 * y * (1.0 + jax.lax.erf(y * _INV_SQRT2))       # exact GELU
        o_ref[i] = y.astype(o_ref.dtype)


# --------------------------------------------------------------------------
# Large-slab fallback kernel: gate precomputed, HW-tiled gated conv + BN + GELU.
# --------------------------------------------------------------------------
def _gated_conv_kernel(s_ref, x_ref, cwf_ref, bn_shift_ref, o_ref):
    xf = x_ref[0].astype(jnp.float32)                           # (C_in, t_hw)
    x_se = xf * s_ref[0]                                        # gate bcast over lanes
    y = jnp.dot(cwf_ref[...], x_se, preferred_element_type=jnp.float32)
    y = y + bn_shift_ref[...]
    y = 0.5 * y * (1.0 + jax.lax.erf(y * _INV_SQRT2))
    o_ref[0] = y.astype(o_ref.dtype)


def conv2d_1_pallas(x_nchw, w1, b1, w2, b2, conv_w,
                    bn_gamma, bn_beta, bn_mean, bn_var, bn_eps=1e-3,
                    force_two_pass=False):
    """x_nchw: (B, C_in, H, W)
       w1: (Cr, C_in)  b1: (Cr,)      SE fc1 (1x1 conv weights, squeezed)
       w2: (C_in, Cr)  b2: (C_in,)    SE fc2
       conv_w: (C_out, C_in)          1x1 conv, no bias
       bn_*: (C_out,)                 BatchNorm2d inference params (eps=1e-3
                                      matches the PyTorch module)."""
    B, C_in, H, W = x_nchw.shape
    Cr = w1.shape[0]
    C_out = conv_w.shape[0]
    HW = H * W
    dtype = x_nchw.dtype
    itemsize = jnp.dtype(dtype).itemsize

    # Fold BN (inference) into the conv weight: y = (conv_w * scale) @ x_se + shift.
    bn_scale = (bn_gamma / jnp.sqrt(bn_var + bn_eps)).astype(jnp.float32)
    bn_shift = (bn_beta - bn_mean * bn_scale).astype(jnp.float32).reshape(C_out, 1)
    cw_folded = (conv_w.astype(jnp.float32) * bn_scale[:, None])

    w1_f = w1.astype(jnp.float32)
    w2_f = w2.astype(jnp.float32)
    b1_2d = b1.reshape(1, Cr).astype(jnp.float32)
    b2_2d = b2.reshape(1, C_in).astype(jnp.float32)

    param_bytes = 4 * (Cr * C_in + Cr + C_in * Cr + C_in + C_out * C_in + C_out)
    budget = _vmem_budget_bytes()

    # Lane-dense output: pad HW to a multiple of 128 (sliced off afterwards).
    HWp = _round_up(HW, 128)
    # Per-batch VMEM footprint: double-buffered I/O blocks + f32 intermediates.
    per_batch_io = (C_in + C_out) * HWp * itemsize
    per_batch_f32 = 2 * (C_in + C_out) * HWp * 4
    per_batch_need = 2 * per_batch_io + per_batch_f32

    flops = int(B * (2 * C_out * C_in * HW + 8 * (C_in + C_out) * HW))
    bytes_accessed = int(B * (C_in + C_out) * HW * itemsize + param_bytes)

    if (not force_two_pass) and (per_batch_need + param_bytes <= budget):
        # ------------------ fast path: fully fused single-pass ------------------
        # Amortize per-grid-step overhead across batches, keeping >= 2 grid steps
        # for pipelining / megacore whenever B >= 2.
        b_blk = 1
        for cand in range(1, B + 1):
            if B % cand:
                continue
            if B >= 2 and (B // cand) < 2:
                continue
            if cand * per_batch_need + param_bytes <= budget:
                b_blk = cand
        grid_b = B // b_blk

        x = x_nchw.reshape(B, C_in, HW)
        if HWp != HW:
            x = jnp.pad(x, ((0, 0), (0, 0), (0, HWp - HW)))

        vmem_limit = int(min(max(b_blk * per_batch_need + param_bytes + (8 << 20),
                                 32 << 20), budget))
        cost = pl.CostEstimate(
            flops=flops,
            transcendentals=int(B * (C_out * HW + C_in)),
            bytes_accessed=bytes_accessed,
        )

        out = pl.pallas_call(
            functools.partial(_fused_kernel, 1.0 / float(HW)),
            out_shape=jax.ShapeDtypeStruct((B, C_out, HWp), dtype),
            grid_spec=pltpu.PrefetchScalarGridSpec(
                num_scalar_prefetch=0,
                grid=(grid_b,),
                in_specs=[
                    pl.BlockSpec((b_blk, C_in, HWp), lambda i: (i, 0, 0)),  # x
                    pl.BlockSpec((Cr, C_in), lambda i: (0, 0)),             # fc1 w
                    pl.BlockSpec((1, Cr), lambda i: (0, 0)),                # fc1 b
                    pl.BlockSpec((C_in, Cr), lambda i: (0, 0)),             # fc2 w
                    pl.BlockSpec((1, C_in), lambda i: (0, 0)),              # fc2 b
                    pl.BlockSpec((C_out, C_in), lambda i: (0, 0)),          # conv*scale
                    pl.BlockSpec((C_out, 1), lambda i: (0, 0)),             # bn shift
                ],
                out_specs=pl.BlockSpec((b_blk, C_out, HWp), lambda i: (i, 0, 0)),
            ),
            compiler_params=pltpu.CompilerParams(
                dimension_semantics=("parallel",),
                vmem_limit_bytes=vmem_limit,
            ),
            cost_estimate=cost,
        )(x, w1_f, b1_2d, w2_f, b2_2d, cw_folded, bn_shift)

        if HWp != HW:
            out = out[:, :, :HW]
        return out.reshape(B, C_out, H, W)

    # ------------- large-slab path: JAX gate + HW-tiled gated conv -------------
    # Extra read of x for the pooling pass is accepted only in this regime.
    hp = jax.lax.Precision.HIGHEST
    pooled = jnp.mean(x_nchw.astype(jnp.float32), axis=(2, 3))          # (B, C_in)
    h = jnp.maximum(jnp.dot(pooled, w1_f.T, precision=hp)
                    + b1.astype(jnp.float32), 0.0)                      # (B, Cr)
    s = jax.nn.sigmoid(jnp.dot(h, w2_f.T, precision=hp)
                       + b2.astype(jnp.float32))                        # (B, C_in)
    s3 = s.reshape(B, C_in, 1)

    # Lane tile: largest multiple of 128 that fits the budget (>= 512 lanes
    # preferred for v5e's single vector-store slot, when the budget allows).
    per_lane = 2 * (C_in + C_out) * itemsize + 2 * (C_in + C_out) * 4
    max_lanes = max((budget - param_bytes) // per_lane, 128)
    t_hw = max(128, min(_round_up(HW, 128), (max_lanes // 128) * 128))
    HWp2 = _round_up(HW, t_hw)

    x = x_nchw.reshape(B, C_in, HW)
    if HWp2 != HW:
        x = jnp.pad(x, ((0, 0), (0, 0), (0, HWp2 - HW)))

    vmem_limit = int(min(max(per_lane * t_hw + param_bytes + (8 << 20), 32 << 20),
                         budget))
    cost = pl.CostEstimate(
        flops=flops,
        transcendentals=int(B * C_out * HW),
        bytes_accessed=bytes_accessed,
    )

    out = pl.pallas_call(
        _gated_conv_kernel,
        out_shape=jax.ShapeDtypeStruct((B, C_out, HWp2), dtype),
        grid_spec=pltpu.PrefetchScalarGridSpec(
            num_scalar_prefetch=0,
            grid=(B, HWp2 // t_hw),
            in_specs=[
                pl.BlockSpec((1, C_in, 1), lambda b, t: (b, 0, 0)),       # SE gate
                pl.BlockSpec((1, C_in, t_hw), lambda b, t: (b, 0, t)),    # x tile
                pl.BlockSpec((C_out, C_in), lambda b, t: (0, 0)),         # conv*scale
                pl.BlockSpec((C_out, 1), lambda b, t: (0, 0)),            # bn shift
            ],
            out_specs=pl.BlockSpec((1, C_out, t_hw), lambda b, t: (b, 0, t)),
        ),
        compiler_params=pltpu.CompilerParams(
            dimension_semantics=("parallel", "parallel"),
            vmem_limit_bytes=vmem_limit,
        ),
        cost_estimate=cost,
    )(s3, x, cw_folded, bn_shift)

    if HWp2 != HW:
        out = out[:, :, :HW]
    return out.reshape(B, C_out, H, W)
    # TODO(synk): optionally keep activations bf16 in HBM (kernel is mem-bound)
    # once the surrounding model tolerates the reduced activation precision.


def conv2d_1_reference(x, w1, b1, w2, b2, conv_w,
                       bn_gamma, bn_beta, bn_mean, bn_var, bn_eps=1e-3):
    """Pure-JAX reference matching the PyTorch forward (eval-mode BN)."""
    hp = jax.lax.Precision.HIGHEST
    pooled = jnp.mean(x, axis=(2, 3))                                       # (B, C_in)
    h = jnp.maximum(jnp.dot(pooled, w1.T, precision=hp) + b1, 0.0)          # (B, Cr)
    s = jax.nn.sigmoid(jnp.dot(h, w2.T, precision=hp) + b2)                 # (B, C_in)
    x_se = x * s[:, :, None, None]
    y = jnp.einsum('oc,bchw->bohw', conv_w, x_se, precision=hp)             # (B, C_out, H, W)
    y = (y - bn_mean[None, :, None, None]) / jnp.sqrt(bn_var + bn_eps)[None, :, None, None]
    y = y * bn_gamma[None, :, None, None] + bn_beta[None, :, None, None]
    return 0.5 * y * (1.0 + jax.lax.erf(y / jnp.float32(math.sqrt(2.0))))


if __name__ == "__main__":
    # Small shapes consistent with the module: reduction=16 needs C_in >= 16.
    B, C_in, H, W = 2, 32, 16, 16
    C_out = 16
    reduction = 16
    Cr = C_in // reduction   # = 2

    key = jax.random.PRNGKey(0)
    kx, k1, k2, k3, k4, k5, k6, k7 = jax.random.split(key, 8)

    x = jax.random.normal(kx, (B, C_in, H, W), dtype=jnp.float32)
    w1 = jax.random.normal(k1, (Cr, C_in), dtype=jnp.float32) * 0.3
    b1 = jax.random.normal(k2, (Cr,), dtype=jnp.float32) * 0.1
    w2 = jax.random.normal(k3, (C_in, Cr), dtype=jnp.float32) * 0.3
    b2 = jax.random.normal(k4, (C_in,), dtype=jnp.float32) * 0.1
    conv_w = jax.random.normal(k5, (C_out, C_in), dtype=jnp.float32) * 0.2
    bn_gamma = 1.0 + 0.1 * jax.random.normal(k6, (C_out,), dtype=jnp.float32)
    bn_beta = 0.1 * jax.random.normal(k7, (C_out,), dtype=jnp.float32)
    bn_mean = 0.05 * jnp.arange(C_out, dtype=jnp.float32)
    bn_var = 1.0 + 0.02 * jnp.arange(C_out, dtype=jnp.float32)

    params = (w1, b1, w2, b2, conv_w, bn_gamma, bn_beta, bn_mean, bn_var)

    # ---- path 1: fused single-pass kernel (HW multiple of 128) ----
    ref = jax.block_until_ready(conv2d_1_reference(x, *params))
    out = jax.block_until_ready(conv2d_1_pallas(x, *params))
    np.testing.assert_allclose(np.asarray(out), np.asarray(ref),
                               rtol=2e-4, atol=2e-5)

    # ---- path 2: fused kernel with lane padding (HW = 196, not /128) ----
    H2 = W2 = 14
    x2 = jax.random.normal(kx, (B, C_in, H2, W2), dtype=jnp.float32)
    ref2 = jax.block_until_ready(conv2d_1_reference(x2, *params))
    out2 = jax.block_until_ready(conv2d_1_pallas(x2, *params))
    np.testing.assert_allclose(np.asarray(out2), np.asarray(ref2),
                               rtol=2e-4, atol=2e-5)

    # ---- path 3: large-slab fallback (JAX gate + HW-tiled gated conv),
    #      force-exercised at small shapes for coverage ----
    out3 = jax.block_until_ready(conv2d_1_pallas(x2, *params, force_two_pass=True))
    np.testing.assert_allclose(np.asarray(out3), np.asarray(ref2),
                               rtol=2e-4, atol=2e-5)

    print("KERNEL_OK")
</pallas_src>

<mosaic_0001>
module attributes {stable_mosaic.version = 11 : i64} {
  func.func @_fused_kernel(%arg0: i32, %arg1: memref<1x32x256xf32, #tpu.memory_space<vmem>>, %arg2: memref<2x32xf32, #tpu.memory_space<vmem>>, %arg3: memref<1x2xf32, #tpu.memory_space<vmem>>, %arg4: memref<32x2xf32, #tpu.memory_space<vmem>>, %arg5: memref<1x32xf32, #tpu.memory_space<vmem>>, %arg6: memref<16x32xf32, #tpu.memory_space<vmem>>, %arg7: memref<16x1xf32, #tpu.memory_space<vmem>>, %arg8: memref<1x16x256xf32, #tpu.memory_space<vmem>>) attributes {dimension_semantics = [#tpu.dimension_semantics<parallel>], iteration_bounds = array<i64: 2>, scalar_prefetch = 0 : i64, scratch_operands = 0 : i64, tpu.core_type = #tpu.core_type<tc>, window_params = [{transform_indices = @transform_0, window_bounds = array<i64: 1, 32, 256>}, {pipeline_mode = #tpu.pipeline_mode<synchronous>, transform_indices = @transform_1, window_bounds = array<i64: 2, 32>}, {pipeline_mode = #tpu.pipeline_mode<synchronous>, transform_indices = @transform_2, window_bounds = array<i64: 1, 2>}, {pipeline_mode = #tpu.pipeline_mode<synchronous>, transform_indices = @transform_3, window_bounds = array<i64: 32, 2>}, {pipeline_mode = #tpu.pipeline_mode<synchronous>, transform_indices = @transform_4, window_bounds = array<i64: 1, 32>}, {pipeline_mode = #tpu.pipeline_mode<synchronous>, transform_indices = @transform_5, window_bounds = array<i64: 16, 32>}, {pipeline_mode = #tpu.pipeline_mode<synchronous>, transform_indices = @transform_6, window_bounds = array<i64: 16, 1>}, {transform_indices = @transform_7, window_bounds = array<i64: 1, 16, 256>}]} {
    %c0 = arith.constant 0 : index
    %c0_0 = arith.constant 0 : index
    %c0_1 = arith.constant 0 : index
    %0 = vector.load %arg1[%c0, %c0_0, %c0_1] : memref<1x32x256xf32, #tpu.memory_space<vmem>>, vector<1x32x256xf32>
    %cst = arith.constant dense<0.000000e+00> : vector<1x32xf32>
    %1 = vector.multi_reduction <add>, %0, %cst [2] : vector<1x32x256xf32> to vector<1x32xf32>
    %cst_2 = arith.constant 3.906250e-03 : f32
    %2 = vector.broadcast %cst_2 : f32 to vector<1x32xf32>
    %3 = arith.mulf %1, %2 : vector<1x32xf32>
    %4 = vector.shape_cast %3 : vector<1x32xf32> to vector<1x1x32xf32>
    %c0_3 = arith.constant 0 : index
    %c0_4 = arith.constant 0 : index
    %5 = vector.load %arg2[%c0_3, %c0_4] : memref<2x32xf32, #tpu.memory_space<vmem>>, vector<2x32xf32>
    %6 = vector.shape_cast %5 : vector<2x32xf32> to vector<1x2x32xf32>
    %7 = vector.broadcast %4 : vector<1x1x32xf32> to vector<1x2x32xf32>
    %8 = arith.mulf %7, %6 : vector<1x2x32xf32>
    %cst_5 = arith.constant dense<0.000000e+00> : vector<1x2xf32>
    %9 = vector.multi_reduction <add>, %8, %cst_5 [2] : vector<1x2x32xf32> to vector<1x2xf32>
    %c0_6 = arith.constant 0 : index
    %c0_7 = arith.constant 0 : index
    %10 = vector.load %arg3[%c0_6, %c0_7] : memref<1x2xf32, #tpu.memory_space<vmem>>, vector<1x2xf32>
    %11 = arith.addf %9, %10 : vector<1x2xf32>
    %cst_8 = arith.constant 0.000000e+00 : f32
    %12 = vector.broadcast %cst_8 : f32 to vector<1x2xf32>
    %13 = arith.maximumf %11, %12 : vector<1x2xf32>
    %14 = vector.shape_cast %13 : vector<1x2xf32> to vector<1x1x2xf32>
    %c0_9 = arith.constant 0 : index
    %c0_10 = arith.constant 0 : index
    %15 = vector.load %arg4[%c0_9, %c0_10] : memref<32x2xf32, #tpu.memory_space<vmem>>, vector<32x2xf32>
    %16 = vector.shape_cast %15 : vector<32x2xf32> to vector<1x32x2xf32>
    %17 = vector.broadcast %14 : vector<1x1x2xf32> to vector<1x32x2xf32>
    %18 = arith.mulf %17, %16 : vector<1x32x2xf32>
    %cst_11 = arith.constant dense<0.000000e+00> : vector<1x32xf32>
    %19 = vector.multi_reduction <add>, %18, %cst_11 [2] : vector<1x32x2xf32> to vector<1x32xf32>
    %c0_12 = arith.constant 0 : index
    %c0_13 = arith.constant 0 : index
    %20 = vector.load %arg5[%c0_12, %c0_13] : memref<1x32xf32, #tpu.memory_space<vmem>>, vector<1x32xf32>
    %21 = arith.addf %19, %20 : vector<1x32xf32>
    %22 = arith.negf %21 : vector<1x32xf32>
    %23 = math.exp %22 : vector<1x32xf32>
    %cst_14 = arith.constant 1.000000e+00 : f32
    %24 = vector.broadcast %cst_14 : f32 to vector<1x32xf32>
    %25 = arith.addf %24, %23 : vector<1x32xf32>
    %26 = arith.divf %24, %25 : vector<1x32xf32>
    %c0_15 = arith.constant 0 : index
    %c0_16 = arith.constant 0 : index
    %27 = vector.load %arg7[%c0_15, %c0_16] : memref<16x1xf32, #tpu.memory_space<vmem>>, vector<16x1xf32>
    %28 = vector.shape_cast %0 : vector<1x32x256xf32> to vector<32x256xf32>
    %29 = vector.shape_cast %26 : vector<1x32xf32> to vector<32xf32>
    %30 = vector.shape_cast %29 : vector<32xf32> to vector<32x1xf32>
    %31 = vector.broadcast %30 : vector<32x1xf32> to vector<32x256xf32>
    %32 = arith.mulf %28, %31 : vector<32x256xf32>
    %c0_17 = arith.constant 0 : index
    %c0_18 = arith.constant 0 : index
    %33 = vector.load %arg6[%c0_17, %c0_18] : memref<16x32xf32, #tpu.memory_space<vmem>>, vector<16x32xf32>
    %cst_19 = arith.constant dense<0.000000e+00> : vector<16x256xf32>
    %34 = tpu.matmul %33, %32, %cst_19 {dimension_numbers = #tpu.dot_dimension_numbers<[1], [0], [0], [1], [0, 0, 1, 1], [], []>} : vector<16x32xf32>, vector<32x256xf32>, vector<16x256xf32> -> vector<16x256xf32>
    %35 = vector.broadcast %27 : vector<16x1xf32> to vector<16x256xf32>
    %36 = arith.addf %34, %35 : vector<16x256xf32>
    %cst_20 = arith.constant 5.000000e-01 : f32
    %37 = vector.broadcast %cst_20 : f32 to vector<16x256xf32>
    %38 = arith.mulf %37, %36 : vector<16x256xf32>
    %cst_21 = arith.constant 0.707106769 : f32
    %39 = vector.broadcast %cst_21 : f32 to vector<16x256xf32>
    %40 = arith.mulf %36, %39 : vector<16x256xf32>
    %41 = math.erf %40 : vector<16x256xf32>
    %cst_22 = arith.constant 1.000000e+00 : f32
    %42 = vector.broadcast %cst_22 : f32 to vector<16x256xf32>
    %43 = arith.addf %42, %41 : vector<16x256xf32>
    %44 = arith.mulf %38, %43 : vector<16x256xf32>
    %c0_23 = arith.constant 0 : index
    %c0_24 = arith.constant 0 : index
    %c0_25 = arith.constant 0 : index
    %45 = vector.load %arg8[%c0_23, %c0_24, %c0_25] : memref<1x16x256xf32, #tpu.memory_space<vmem>>, vector<1x16x256xf32>
    %46 = vector.shape_cast %45 : vector<1x16x256xf32> to vector<16x256xf32>
    %47 = vector.shape_cast %44 : vector<16x256xf32> to vector<1x16x256xf32>
    tpu.vector_store %arg8[%c0_23, %c0_24, %c0_25], %47 {strides = array<i32>} : memref<1x16x256xf32, #tpu.memory_space<vmem>>, vector<1x16x256xf32>,
    return
  }
  func.func @transform_0(%arg0: i32) -> (i32, i32, i32) {
    %c0_i32 = arith.constant 0 : i32
    %c0_i32_0 = arith.constant 0 : i32
    %c0_i32_1 = arith.constant 0 : i32
    return %arg0, %c0_i32, %c0_i32_0 : i32, i32, i32
  }
  func.func @transform_1(%arg0: i32) -> (i32, i32) {
    %c0_i32 = arith.constant 0 : i32
    %c0_i32_0 = arith.constant 0 : i32
    %c0_i32_1 = arith.constant 0 : i32
    return %c0_i32, %c0_i32_0 : i32, i32
  }
  func.func @transform_2(%arg0: i32) -> (i32, i32) {
    %c0_i32 = arith.constant 0 : i32
    %c0_i32_0 = arith.constant 0 : i32
    %c0_i32_1 = arith.constant 0 : i32
    return %c0_i32, %c0_i32_0 : i32, i32
  }
  func.func @transform_3(%arg0: i32) -> (i32, i32) {
    %c0_i32 = arith.constant 0 : i32
    %c0_i32_0 = arith.constant 0 : i32
    %c0_i32_1 = arith.constant 0 : i32
    return %c0_i32, %c0_i32_0 : i32, i32
  }
  func.func @transform_4(%arg0: i32) -> (i32, i32) {
    %c0_i32 = arith.constant 0 : i32
    %c0_i32_0 = arith.constant 0 : i32
    %c0_i32_1 = arith.constant 0 : i32
    return %c0_i32, %c0_i32_0 : i32, i32
  }
  func.func @transform_5(%arg0: i32) -> (i32, i32) {
    %c0_i32 = arith.constant 0 : i32
    %c0_i32_0 = arith.constant 0 : i32
    %c0_i32_1 = arith.constant 0 : i32
    return %c0_i32, %c0_i32_0 : i32, i32
  }
  func.func @transform_6(%arg0: i32) -> (i32, i32) {
    %c0_i32 = arith.constant 0 : i32
    %c0_i32_0 = arith.constant 0 : i32
    %c0_i32_1 = arith.constant 0 : i32
    return %c0_i32, %c0_i32_0 : i32, i32
  }
  func.func @transform_7(%arg0: i32) -> (i32, i32, i32) {
    %c0_i32 = arith.constant 0 : i32
    %c0_i32_0 = arith.constant 0 : i32
    %c0_i32_1 = arith.constant 0 : i32
    return %arg0, %c0_i32, %c0_i32_0 : i32, i32, i32
  }
}

</mosaic_0001>

<llo_original>
// kernel: tpu_custom_call.1
$region0: #{tpu_custom_call.1}
  #allocation0 [shape = 'u32[]', space=smem, size = 0x4, offset = 0x4, fixed_abs, tag = 'smem constant byte address 0x4 - core index']
  #allocation1 [shape = 'u32[144,128]{1,0:T(1,128)}', space=vmem, size = 0x12000, scoped, tag = 'internal scratch']
  %s0 = inlined_call_operand.hbm [shape: f32[2,32,256], index: 0, kind: input, shape index: {}]
  %s1 = inlined_call_operand.vmem [shape: f32[2,32], index: 1, kind: input, shape index: {}]
  %s2 = inlined_call_operand.vmem [shape: f32[1,2], index: 2, kind: input, shape index: {}]
  %s3 = inlined_call_operand.vmem [shape: f32[32,2], index: 3, kind: input, shape index: {}]
  %s4 = inlined_call_operand.vmem [shape: f32[1,32], index: 4, kind: input, shape index: {}]
  %s5 = inlined_call_operand.vmem [shape: f32[16,32], index: 5, kind: input, shape index: {}]
  %s6 = inlined_call_operand.vmem [shape: f32[16,1], index: 6, kind: input, shape index: {}]
  %s7 = inlined_call_operand.hbm [shape: f32[2,16,256], index: 7, kind: output, shape index: {}]
  %s8 = sld [smem:[#allocation0]]
  $region65: #{tpu_custom_call.1} parent=0
    _
  %s10 = ssub.s32 1, %s8
  %s11 = scalar_select 0, %s10, %s8
  $region1: #{tpu_custom_call.1} parent=0
    #allocation2 [shape = 'u8[65536]{0}', space=vmem, size = 0x10000, scoped, tag = 'input window, operand 0']
    #allocation3 [shape = 's32[2]{0}', space=sflag, size = 0x8, scoped, tag = 'scoped memory for tpu_custom_call.1']
    #allocation4 [shape = 's32[2]{0}', space=sflag, size = 0x8, scoped, tag = 'scoped memory for tpu_custom_call.1']
    #allocation5 [shape = 'u8[32768]{0}', space=vmem, size = 0x8000, scoped, tag = 'output window, operand 0']
    %12 = vsyncpa [#allocation3], 0
    %s13 = scalar_lea.sflag [#allocation3], 1
    %14 = vsyncpa %s13, 0
    %15 = vsyncpa [#allocation4], 0
    %s16 = scalar_lea.sflag [#allocation4], 1
    %17 = vsyncpa %s16, 0
    loop: start=0, step=1, limit=4
    $region2: #{tpu_custom_call.1} parent=1 // loop_pre_header
      _
    $region3: #{tpu_custom_call.1} parent=1 // loop_header
      %s19 = sphi 0, %s23
      %p20 = scmp.ge.s32.totalorder %s19, 4
      %s29 = sphi 0, %s31
      %s32 = sphi 0, %s29
      %s33 = sphi 0, %s32
      %s49 = sphi 0, %s33
      %s53 = sphi 0, %s53
      %s55 = sphi 0, %s53
      %s56 = sphi 0, %s55
      %s70 = sphi 0, %s56
      %s74 = sphi 0, %s74
      %s76 = sphi 0, %s74
      %s77 = sphi 0, %s76
      %s91 = sphi 0, %s77
      %s95 = sphi 0, %s95
      %s97 = sphi 0, %s95
      %s98 = sphi 0, %s97
      %s112 = sphi 0, %s98
      %s116 = sphi 0, %s116
      %s118 = sphi 0, %s116
      %s119 = sphi 0, %s118
      %s133 = sphi 0, %s119
      %s137 = sphi 0, %s137
      %s139 = sphi 0, %s137
      %s140 = sphi 0, %s139
      %s154 = sphi 0, %s140
      %s158 = sphi 0, %s158
      %s160 = sphi 0, %s158
      %s161 = sphi 0, %s160
      %s175 = sphi 0, %s161
      %s181 = sphi 0, %s183
      %s184 = sphi 0, %s181
      %s185 = sphi 0, %s184
      %s201 = sphi 0, %s185
    $region4: #{tpu_custom_call.1} parent=1 // loop_header_branch
      %22 = sbr.rel (%p20) target = $region8
    $region5: #{tpu_custom_call.1} parent=1 // loop_body
      %s24 = ssub.s32 %s19, 1
      %s25 = ssub.s32 %s19, 2
      %s26 = sadd.s32 %s19, 1
      %s27 = ssub.s32 %s19, %s26
      %p28 = scmp.eq.s32.totalorder %s27, 0
      %s30 = sadd.s32 %s29, 1
      %s31 = scalar_select %p28, %s29, %s30
      %p34 = pneg %p28
      %p35 = scmp.eq.s32.totalorder %s19, 1
      %p36 = por %p34, %p35
      %p37 = scmp.ne.s32.totalorder %s29, %s32
      %p38 = scmp.eq.s32.totalorder %s19, 0
      %p39 = por %p37, %p38
      %p40 = scmp.ne.s32.totalorder %s29, %s32
      %p41 = scmp.eq.s32.totalorder %s24, 1
      %p42 = por %p40, %p41
      %p43 = scmp.ne.s32.totalorder %s32, %s33
      %p44 = scmp.eq.s32.totalorder %s24, 0
      %p45 = por %p43, %p44
      %p46 = scmp.ne.s32.totalorder %s32, %s33
      %p47 = scmp.eq.s32.totalorder %s25, 1
      %p48 = por %p46, %p47
      %p50 = scmp.ne.s32.totalorder %s33, %s49
      %p51 = scmp.eq.s32.totalorder %s25, 0
      %p52 = por %p50, %p51
      %s54 = sadd.s32 %s53, 1
      %p57 = scmp.eq.s32.totalorder %s19, 1
      %p58 = scmp.ne.s32.totalorder %s53, %s55
      %p59 = scmp.eq.s32.totalorder %s19, 0
      %p60 = por %p58, %p59
      %p61 = scmp.ne.s32.totalorder %s53, %s55
      %p62 = scmp.eq.s32.totalorder %s24, 1
      %p63 = por %p61, %p62
      %p64 = scmp.ne.s32.totalorder %s55, %s56
      %p65 = scmp.eq.s32.totalorder %s24, 0
      %p66 = por %p64, %p65
      %p67 = scmp.ne.s32.totalorder %s55, %s56
      %p68 = scmp.eq.s32.totalorder %s25, 1
      %p69 = por %p67, %p68
      %p71 = scmp.ne.s32.totalorder %s56, %s70
      %p72 = scmp.eq.s32.totalorder %s25, 0
      %p73 = por %p71, %p72
      %s75 = sadd.s32 %s74, 1
      %p78 = scmp.eq.s32.totalorder %s19, 1
      %p79 = scmp.ne.s32.totalorder %s74, %s76
      %p80 = scmp.eq.s32.totalorder %s19, 0
      %p81 = por %p79, %p80
      %p82 = scmp.ne.s32.totalorder %s74, %s76
      %p83 = scmp.eq.s32.totalorder %s24, 1
      %p84 = por %p82, %p83
      %p85 = scmp.ne.s32.totalorder %s76, %s77
      %p86 = scmp.eq.s32.totalorder %s24, 0
      %p87 = por %p85, %p86
      %p88 = scmp.ne.s32.totalorder %s76, %s77
      %p89 = scmp.eq.s32.totalorder %s25, 1
      %p90 = por %p88, %p89
      %p92 = scmp.ne.s32.totalorder %s77, %s91
      %p93 = scmp.eq.s32.totalorder %s25, 0
      %p94 = por %p92, %p93
      %s96 = sadd.s32 %s95, 1
      %p99 = scmp.eq.s32.totalorder %s19, 1
      %p100 = scmp.ne.s32.totalorder %s95, %s97
      %p101 = scmp.eq.s32.totalorder %s19, 0
      %p102 = por %p100, %p101
      %p103 = scmp.ne.s32.totalorder %s95, %s97
      %p104 = scmp.eq.s32.totalorder %s24, 1
      %p105 = por %p103, %p104
      %p106 = scmp.ne.s32.totalorder %s97, %s98
      %p107 = scmp.eq.s32.totalorder %s24, 0
      %p108 = por %p106, %p107
      %p109 = scmp.ne.s32.totalorder %s97, %s98
      %p110 = scmp.eq.s32.totalorder %s25, 1
      %p111 = por %p109, %p110
      %p113 = scmp.ne.s32.totalorder %s98, %s112
      %p114 = scmp.eq.s32.totalorder %s25, 0
      %p115 = por %p113, %p114
      %s117 = sadd.s32 %s116, 1
      %p120 = scmp.eq.s32.totalorder %s19, 1
      %p121 = scmp.ne.s32.totalorder %s116, %s118
      %p122 = scmp.eq.s32.totalorder %s19, 0
      %p123 = por %p121, %p122
      %p124 = scmp.ne.s32.totalorder %s116, %s118
      %p125 = scmp.eq.s32.totalorder %s24, 1
      %p126 = por %p124, %p125
      %p127 = scmp.ne.s32.totalorder %s118, %s119
      %p128 = scmp.eq.s32.totalorder %s24, 0
      %p129 = por %p127, %p128
      %p130 = scmp.ne.s32.totalorder %s118, %s119
      %p131 = scmp.eq.s32.totalorder %s25, 1
      %p132 = por %p130, %p131
      %p134 = scmp.ne.s32.totalorder %s119, %s133
      %p135 = scmp.eq.s32.totalorder %s25, 0
      %p136 = por %p134, %p135
      %s138 = sadd.s32 %s137, 1
      %p141 = scmp.eq.s32.totalorder %s19, 1
      %p142 = scmp.ne.s32.totalorder %s137, %s139
      %p143 = scmp.eq.s32.totalorder %s19, 0
      %p144 = por %p142, %p143
      %p145 = scmp.ne.s32.totalorder %s137, %s139
      %p146 = scmp.eq.s32.totalorder %s24, 1
      %p147 = por %p145, %p146
      %p148 = scmp.ne.s32.totalorder %s139, %s140
      %p149 = scmp.eq.s32.totalorder %s24, 0
      %p150 = por %p148, %p149
      %p151 = scmp.ne.s32.totalorder %s139, %s140
      %p152 = scmp.eq.s32.totalorder %s25, 1
      %p153 = por %p151, %p152
      %p155 = scmp.ne.s32.totalorder %s140, %s154
      %p156 = scmp.eq.s32.totalorder %s25, 0
      %p157 = por %p155, %p156
      %s159 = sadd.s32 %s158, 1
      %p162 = scmp.eq.s32.totalorder %s19, 1
      %p163 = scmp.ne.s32.totalorder %s158, %s160
      %p164 = scmp.eq.s32.totalorder %s19, 0
      %p165 = por %p163, %p164
      %p166 = scmp.ne.s32.totalorder %s158, %s160
      %p167 = scmp.eq.s32.totalorder %s24, 1
      %p168 = por %p166, %p167
      %p169 = scmp.ne.s32.totalorder %s160, %s161
      %p170 = scmp.eq.s32.totalorder %s24, 0
      %p171 = por %p169, %p170
      %p172 = scmp.ne.s32.totalorder %s160, %s161
      %p173 = scmp.eq.s32.totalorder %s25, 1
      %p174 = por %p172, %p173
      %p176 = scmp.ne.s32.totalorder %s161, %s175
      %p177 = scmp.eq.s32.totalorder %s25, 0
      %p178 = por %p176, %p177
      %s179 = ssub.s32 %s19, %s26
      %p180 = scmp.eq.s32.totalorder %s179, 0
      %s182 = sadd.s32 %s181, 1
      %s183 = scalar_select %p180, %s181, %s182
      %p186 = pneg %p180
      %p187 = scmp.eq.s32.totalorder %s19, 1
      %p188 = por %p186, %p187
      %p189 = scmp.ne.s32.totalorder %s181, %s184
      %p190 = scmp.eq.s32.totalorder %s19, 0
      %p191 = por %p189, %p190
      %p192 = scmp.ne.s32.totalorder %s181, %s184
      %p193 = scmp.eq.s32.totalorder %s24, 1
      %p194 = por %p192, %p193
      %p195 = scmp.ne.s32.totalorder %s184, %s185
      %p196 = scmp.eq.s32.totalorder %s24, 0
      %p197 = por %p195, %p196
      %p198 = scmp.ne.s32.totalorder %s184, %s185
      %p199 = scmp.eq.s32.totalorder %s25, 1
      %p200 = por %p198, %p199
      %p202 = scmp.ne.s32.totalorder %s185, %s201
      %p203 = scmp.eq.s32.totalorder %s25, 0
      %p204 = por %p202, %p203
      %p205 = scmp.le.s32.totalorder 1, %s19
      %p206 = scmp.lt.s32.totalorder %s19, 3
      %p207 = pnand %p205, %p206
      %p208 = pneg %p207
      // Predicated region
      $region9: #{tpu_custom_call.1} parent=5 // pred_check
        _
      $region10: #{tpu_custom_call.1} parent=5 // pred_check_branch
        %210 = sbr.rel (%p207) target = $region12
      $region11: #{tpu_custom_call.1} parent=5 // pred_region
        %s211 = ssub.s32 %s19, 1
        // Predicated region
        $region13: #{tpu_custom_call.1} parent=11 // pred_check
          %p212 = pneg %p66
        $region14: #{tpu_custom_call.1} parent=11 // pred_check_branch
          %214 = sbr.rel (%p212) target = $region16
        $region15: #{tpu_custom_call.1} parent=11 // pred_region
          _
        $region16: #{tpu_custom_call.1} parent=11 // pred_fallthru
          _
        // Predicated region
        $region17: #{tpu_custom_call.1} parent=11 // pred_check
          %p215 = pneg %p87
        $region18: #{tpu_custom_call.1} parent=11 // pred_check_branch
          %217 = sbr.rel (%p215) target = $region20
        $region19: #{tpu_custom_call.1} parent=11 // pred_region
          _
        $region20: #{tpu_custom_call.1} parent=11 // pred_fallthru
          _
        // Predicated region
        $region21: #{tpu_custom_call.1} parent=11 // pred_check
          %p218 = pneg %p108
        $region22: #{tpu_custom_call.1} parent=11 // pred_check_branch
          %220 = sbr.rel (%p218) target = $region24
        $region23: #{tpu_custom_call.1} parent=11 // pred_region
          _
        $region24: #{tpu_custom_call.1} parent=11 // pred_fallthru
          _
        // Predicated region
        $region25: #{tpu_custom_call.1} parent=11 // pred_check
          %p221 = pneg %p129
        $region26: #{tpu_custom_call.1} parent=11 // pred_check_branch
          %223 = sbr.rel (%p221) target = $region28
        $region27: #{tpu_custom_call.1} parent=11 // pred_region
          _
        $region28: #{tpu_custom_call.1} parent=11 // pred_fallthru
          _
        // Predicated region
        $region29: #{tpu_custom_call.1} parent=11 // pred_check
          %p224 = pneg %p150
        $region30: #{tpu_custom_call.1} parent=11 // pred_check_branch
          %226 = sbr.rel (%p224) target = $region32
        $region31: #{tpu_custom_call.1} parent=11 // pred_region
          _
        $region32: #{tpu_custom_call.1} parent=11 // pred_fallthru
          _
        // Predicated region
        $region33: #{tpu_custom_call.1} parent=11 // pred_check
          %p227 = pneg %p171
        $region34: #{tpu_custom_call.1} parent=11 // pred_check_branch
          %229 = sbr.rel (%p227) target = $region36
        $region35: #{tpu_custom_call.1} parent=11 // pred_region
          _
        $region36: #{tpu_custom_call.1} parent=11 // pred_fallthru
          _
      $region12: #{tpu_custom_call.1} parent=5 // pred_fallthru
        _
      %p230 = scmp.lt.s32.totalorder %s19, 2
      // Predicated region
      $region37: #{tpu_custom_call.1} parent=5 // pred_check
        %p231 = pneg %p230
      $region38: #{tpu_custom_call.1} parent=5 // pred_check_branch
        %233 = sbr.rel (%p231) target = $region40
      $region39: #{tpu_custom_call.1} parent=5 // pred_region
        // Predicated region
        $region41: #{tpu_custom_call.1} parent=39 // pred_check
          %p234 = pneg %p39
        $region42: #{tpu_custom_call.1} parent=39 // pred_check_branch
          %236 = sbr.rel (%p234) target = $region44
        $region43: #{tpu_custom_call.1} parent=39 // pred_region
          %s237 = sand.u32 %s29, 1
          %s238 = scalar_lea.sflag [#allocation3], %s237
          %s239 = sand.u32 %s29, 1
          %s240 = smul.addr %s239, 64
          %s241 = scalar_lea.vmem [#allocation2], %s240
          %s243 = ssub.s32 1024, 1024
          %244 = vsyncadd %s238, %s243
          %s245 = smul.addr %s19, 8
          %s246 = smul.addr %s245, 128
          %s247 = scalar_lea.hbm %s0, %s246
          %s248 = sshll.u32 %s241, 4
          %s249 = int_to_ptr.vmem [resolvable:$true] %s248
          %254 = dma.hbm_to_vmem [thread:$0]  %s247, 1024, %s249, %s238, 256, 256, 16
        $region44: #{tpu_custom_call.1} parent=39 // pred_fallthru
          _
      $region40: #{tpu_custom_call.1} parent=5 // pred_fallthru
        _
      %p255 = scmp.le.s32.totalorder 1, %s19
      %p256 = scmp.lt.s32.totalorder %s19, 3
      %p257 = pnand %p255, %p256
      %p258 = pneg %p257
      // Predicated region
      $region45: #{tpu_custom_call.1} parent=5 // pred_check
        _
      $region46: #{tpu_custom_call.1} parent=5 // pred_check_branch
        %260 = sbr.rel (%p257) target = $region48
      $region47: #{tpu_custom_call.1} parent=5 // pred_region
        %s261 = ssub.s32 %s19, 1
        %s262 = sand.u32 %s32, 1
        %s263 = scalar_lea.sflag [#allocation3], %s262
        %s264 = sand.u32 %s32, 1
        %s265 = smul.addr %s264, 64
        %s266 = scalar_lea.vmem [#allocation2], %s265
        // Predicated region
        $region49: #{tpu_custom_call.1} parent=47 // pred_check
          %p267 = pneg %p45
        $region50: #{tpu_custom_call.1} parent=47 // pred_check_branch
          %269 = sbr.rel (%p267) target = $region52
        $region51: #{tpu_custom_call.1} parent=47 // pred_region
          %270 = dma.done %s263, 1024
        $region52: #{tpu_custom_call.1} parent=47 // pred_fallthru
          _
        %s271 = sand.u32 %s32, 1
        %s272 = scalar_lea.sflag [#allocation3], %s271
        %s273 = sand.u32 %s32, 1
        %s274 = smul.addr %s273, 64
        %s275 = scalar_lea.vmem [#allocation2], %s274
        %p276 = pneg %p45
        %p277 = pneg %p42
        %p278 = pneg %p66
        %p279 = pneg %p63
        %p280 = pneg %p87
        %p281 = pneg %p84
        %p282 = pneg %p108
        %p283 = pneg %p105
        %p284 = pneg %p129
        %p285 = pneg %p126
        %p286 = pneg %p150
        %p287 = pneg %p147
        %p288 = pneg %p171
        %p289 = pneg %p168
        %p290 = pneg %p197
        %p291 = pneg %p194
        %s292 = sand.u32 %s184, 1
        %s293 = scalar_lea.sflag [#allocation4], %s292
        %s294 = sand.u32 %s184, 1
        %s295 = smul.addr %s294, 32
        %s296 = scalar_lea.vmem [#allocation5], %s295
        %v297 = vld [vmem:[%s266] sm:$0xff]
        %v298 = vld [vmem:[%s266 + $0x8] sm:$0xff]
        %v299 = vld [vmem:[%s266 + $0x10] sm:$0xff]
        %v300 = vld [vmem:[%s266 + $0x18] sm:$0xff]
        %v301 = vld [vmem:[%s266 + $0x20] sm:$0xff]
        %v302 = vld [vmem:[%s266 + $0x28] sm:$0xff]
        %v303 = vld [vmem:[%s266 + $0x30] sm:$0xff]
        %v304 = vld [vmem:[%s266 + $0x38] sm:$0xff]
        %v305 = vadd.f32 %v297, %v298
        %306 = vadd.xlane.f32.xlu0 %v305
        %v307 = vpop.xlane.xlu0 %306
        %v308 = vadd.f32 %v299, %v300
        %309 = vadd.xlane.f32.xlu0 %v308
        %v310 = vpop.xlane.xlu0 %309
        %v311 = vadd.f32 %v301, %v302
        %312 = vadd.xlane.f32.xlu0 %v311
        %v313 = vpop.xlane.xlu0 %312
        %v314 = vadd.f32 %v303, %v304
        %315 = vadd.xlane.f32.xlu0 %v314
        %v316 = vpop.xlane.xlu0 %315
        %v317 = vmul.f32 %v307, 0.00390625
        %v318 = vmul.f32 %v310, 0.00390625
        %v319 = vmul.f32 %v313, 0.00390625
        %v320 = vmul.f32 %v316, 0.00390625
        %v321 = vld [vmem:[%s1] sm:$0x3]
        %v323 = vlaneseq
        %v324 = vshrl.u32 %v323, 7
        %v325 = vsub.s32 0, %v324
        %v326 = vrot.slane %v321, %v325
        %328 = vbcast.lane.b32.xlu0 %v326, 256
        %v329 = vpop.permute.xlu0 %328
        %s331 = sor.u32 256, 8
        %332 = vbcast.lane.b32.xlu0 %v326, %s331
        %v333 = vpop.permute.xlu0 %332
        %s335 = sor.u32 256, 16
        %336 = vbcast.lane.b32.xlu0 %v326, %s335
        %v337 = vpop.permute.xlu0 %336
        %s339 = sor.u32 256, 24
        %340 = vbcast.lane.b32.xlu0 %v326, %s339
        %v341 = vpop.permute.xlu0 %340
        %v342 = vlaneseq
        %v343 = vshrl.u32 %v342, 7
        %v344 = vsub.s32 1, %v343
        %v345 = vrot.slane %v321, %v344
        %347 = vbcast.lane.b32.xlu0 %v345, 256
        %v348 = vpop.permute.xlu0 %347
        %s350 = sor.u32 256, 8
        %351 = vbcast.lane.b32.xlu0 %v345, %s350
        %v352 = vpop.permute.xlu0 %351
        %s354 = sor.u32 256, 16
        %355 = vbcast.lane.b32.xlu0 %v345, %s354
        %v356 = vpop.permute.xlu0 %355
        %s358 = sor.u32 256, 24
        %359 = vbcast.lane.b32.xlu0 %v345, %s358
        %v360 = vpop.permute.xlu0 %359
        %v369 = vmul.f32 %v317, %v329
        %v370 = vmul.f32 %v318, %v333
        %v371 = vmul.f32 %v319, %v337
        %v372 = vmul.f32 %v320, %v341
        %v373 = vmul.f32 %v317, %v348
        %v374 = vmul.f32 %v318, %v352
        %v375 = vmul.f32 %v319, %v356
        %v376 = vmul.f32 %v320, %v360
        %385 = vset.pattern.permute.xlu0 0
        %386 = vperm.xlu0 %385, %v369
        %v387 = vpop.permute.xlu0 %386
        %388 = vset.pattern.permute.xlu0 0
        %389 = vperm.xlu0 %388, %v370
        %v390 = vpop.permute.xlu0 %389
        %391 = vset.pattern.permute.xlu0 0
        %392 = vperm.xlu0 %391, %v371
        %v393 = vpop.permute.xlu0 %392
        %394 = vset.pattern.permute.xlu0 0
        %395 = vperm.xlu0 %394, %v372
        %v396 = vpop.permute.xlu0 %395
        %397 = vset.pattern.permute.xlu0 0
        %398 = vperm.xlu0 %397, %v373
        %v399 = vpop.permute.xlu0 %398
        %400 = vset.pattern.permute.xlu0 0
        %401 = vperm.xlu0 %400, %v374
        %v402 = vpop.permute.xlu0 %401
        %403 = vset.pattern.permute.xlu0 0
        %404 = vperm.xlu0 %403, %v375
        %v405 = vpop.permute.xlu0 %404
        %406 = vset.pattern.permute.xlu0 0
        %407 = vperm.xlu0 %406, %v376
        %v408 = vpop.permute.xlu0 %407
        %v409 = vlaneseq
        %v410 = vand.u32 %v409, 127
        %v411 = vlaneseq
        %v412 = vshrl.u32 %v411, 7
        %v413 = vsub.s32 %v410, %v412
        %v414 = vrot.slane %v387, %v413
        %v415 = vadd.s32 %v410, 4294967288
        %v416 = vlaneseq
        %v417 = vshrl.u32 %v416, 7
        %v418 = vsub.s32 %v415, %v417
        %v419 = vrot.slane %v390, %v418
        %vm420 = vcmask 130112
        %v421 = vsel %vm420, %v419, %v414
        %v422 = vadd.s32 %v410, 4294967280
        %v423 = vlaneseq
        %v424 = vshrl.u32 %v423, 7
        %v425 = vsub.s32 %v422, %v424
        %v426 = vrot.slane %v393, %v425
        %vm427 = vcmask 195712
        %v428 = vsel %vm427, %v426, %v421
        %v429 = vadd.s32 %v410, 4294967272
        %v430 = vlaneseq
        %v431 = vshrl.u32 %v430, 7
        %v432 = vsub.s32 %v429, %v431
        %v433 = vrot.slane %v396, %v432
        %vm434 = vcmask 261312
        %v435 = vsel %vm434, %v433, %v428
        %v436 = vlaneseq
        %v437 = vshrl.u32 %v436, 7
        %v438 = vsub.s32 %v410, %v437
        %v439 = vrot.slane %v399, %v438
        %v440 = vlaneseq
        %v441 = vshrl.u32 %v440, 7
        %v442 = vsub.s32 %v415, %v441
        %v443 = vrot.slane %v402, %v442
        %v444 = vsel %vm420, %v443, %v439
        %v445 = vlaneseq
        %v446 = vshrl.u32 %v445, 7
        %v447 = vsub.s32 %v422, %v446
        %v448 = vrot.slane %v405, %v447
        %v449 = vsel %vm427, %v448, %v444
        %v450 = vlaneseq
        %v451 = vshrl.u32 %v450, 7
        %v452 = vsub.s32 %v429, %v451
        %v453 = vrot.slane %v408, %v452
        %v454 = vsel %vm434, %v453, %v449
        %vm455 = vcmask 1041409
        %v456 = vsel %vm455, %v454, %v435
        %vm458 = vcmask 254976
        %v459 = vsel %vm458, %v456, 0.0
        %460 = vadd.xlane.f32.xlu0 %v459
        %v461 = vpop.xlane.xlu0 %460
        %v462 = vld [vmem:[%s2] sm:$0x1]
        %v464 = vlaneseq
        %v465 = vshrl.u32 %v464, 7
        %v466 = vsub.s32 0, %v465
        %v467 = vrot.slane %v462, %v466
        %469 = vbcast.lane.b32.xlu0 %v467, 256
        %v470 = vpop.permute.xlu0 %469
        %v472 = vadd.f32 %v461, %v470
        %v473 = vmax.f32 %v472, 0.0
        %v474 = vld [vmem:[%s3] sm:$0xff]
        %v475 = vld [vmem:[%s3 + $0x8] sm:$0xff]
        %v476 = vld [vmem:[%s3 + $0x10] sm:$0xff]
        %v477 = vld [vmem:[%s3 + $0x18] sm:$0xff]
        %v482 = vlaneseq
        %v483 = vshrl.u32 %v482, 7
        %v484 = vsub.s32 0, %v483
        %v485 = vrot.slane %v474, %v484
        %487 = vbcast.lane.b32.xlu0 %v485, 256
        %v488 = vpop.permute.xlu0 %487
        %v489 = vlaneseq
        %v490 = vshrl.u32 %v489, 7
        %v491 = vsub.s32 1, %v490
        %v492 = vrot.slane %v474, %v491
        %494 = vbcast.lane.b32.xlu0 %v492, 256
        %v495 = vpop.permute.xlu0 %494
        %v496 = vlaneseq
        %v497 = vshrl.u32 %v496, 7
        %v498 = vsub.s32 2, %v497
        %v499 = vrot.slane %v474, %v498
        %501 = vbcast.lane.b32.xlu0 %v499, 256
        %v502 = vpop.permute.xlu0 %501
        %v503 = vlaneseq
        %v504 = vshrl.u32 %v503, 7
        %v505 = vsub.s32 3, %v504
        %v506 = vrot.slane %v474, %v505
        %508 = vbcast.lane.b32.xlu0 %v506, 256
        %v509 = vpop.permute.xlu0 %508
        %v510 = vlaneseq
        %v511 = vshrl.u32 %v510, 7
        %v512 = vsub.s32 4, %v511
        %v513 = vrot.slane %v474, %v512
        %515 = vbcast.lane.b32.xlu0 %v513, 256
        %v516 = vpop.permute.xlu0 %515
        %v517 = vlaneseq
        %v518 = vshrl.u32 %v517, 7
        %v519 = vsub.s32 5, %v518
        %v520 = vrot.slane %v474, %v519
        %522 = vbcast.lane.b32.xlu0 %v520, 256
        %v523 = vpop.permute.xlu0 %522
        %v524 = vlaneseq
        %v525 = vshrl.u32 %v524, 7
        %v526 = vsub.s32 6, %v525
        %v527 = vrot.slane %v474, %v526
        %529 = vbcast.lane.b32.xlu0 %v527, 256
        %v530 = vpop.permute.xlu0 %529
        %v531 = vlaneseq
        %v532 = vshrl.u32 %v531, 7
        %v533 = vsub.s32 7, %v532
        %v534 = vrot.slane %v474, %v533
        %536 = vbcast.lane.b32.xlu0 %v534, 256
        %v537 = vpop.permute.xlu0 %536
        %v538 = vlaneseq
        %v539 = vshrl.u32 %v538, 7
        %v540 = vsub.s32 0, %v539
        %v541 = vrot.slane %v475, %v540
        %543 = vbcast.lane.b32.xlu0 %v541, 256
        %v544 = vpop.permute.xlu0 %543
        %v545 = vlaneseq
        %v546 = vshrl.u32 %v545, 7
        %v547 = vsub.s32 1, %v546
        %v548 = vrot.slane %v475, %v547
        %550 = vbcast.lane.b32.xlu0 %v548, 256
        %v551 = vpop.permute.xlu0 %550
        %v552 = vlaneseq
        %v553 = vshrl.u32 %v552, 7
        %v554 = vsub.s32 2, %v553
        %v555 = vrot.slane %v475, %v554
        %557 = vbcast.lane.b32.xlu0 %v555, 256
        %v558 = vpop.permute.xlu0 %557
        %v559 = vlaneseq
        %v560 = vshrl.u32 %v559, 7
        %v561 = vsub.s32 3, %v560
        %v562 = vrot.slane %v475, %v561
        %564 = vbcast.lane.b32.xlu0 %v562, 256
        %v565 = vpop.permute.xlu0 %564
        %v566 = vlaneseq
        %v567 = vshrl.u32 %v566, 7
        %v568 = vsub.s32 4, %v567
        %v569 = vrot.slane %v475, %v568
        %571 = vbcast.lane.b32.xlu0 %v569, 256
        %v572 = vpop.permute.xlu0 %571
        %v573 = vlaneseq
        %v574 = vshrl.u32 %v573, 7
        %v575 = vsub.s32 5, %v574
        %v576 = vrot.slane %v475, %v575
        %578 = vbcast.lane.b32.xlu0 %v576, 256
        %v579 = vpop.permute.xlu0 %578
        %v580 = vlaneseq
        %v581 = vshrl.u32 %v580, 7
        %v582 = vsub.s32 6, %v581
        %v583 = vrot.slane %v475, %v582
        %585 = vbcast.lane.b32.xlu0 %v583, 256
        %v586 = vpop.permute.xlu0 %585
        %v587 = vlaneseq
        %v588 = vshrl.u32 %v587, 7
        %v589 = vsub.s32 7, %v588
        %v590 = vrot.slane %v475, %v589
        %592 = vbcast.lane.b32.xlu0 %v590, 256
        %v593 = vpop.permute.xlu0 %592
        %v594 = vlaneseq
        %v595 = vshrl.u32 %v594, 7
        %v596 = vsub.s32 0, %v595
        %v597 = vrot.slane %v476, %v596
        %599 = vbcast.lane.b32.xlu0 %v597, 256
        %v600 = vpop.permute.xlu0 %599
        %v601 = vlaneseq
        %v602 = vshrl.u32 %v601, 7
        %v603 = vsub.s32 1, %v602
        %v604 = vrot.slane %v476, %v603
        %606 = vbcast.lane.b32.xlu0 %v604, 256
        %v607 = vpop.permute.xlu0 %606
        %v608 = vlaneseq
        %v609 = vshrl.u32 %v608, 7
        %v610 = vsub.s32 2, %v609
        %v611 = vrot.slane %v476, %v610
        %613 = vbcast.lane.b32.xlu0 %v611, 256
        %v614 = vpop.permute.xlu0 %613
        %v615 = vlaneseq
        %v616 = vshrl.u32 %v615, 7
        %v617 = vsub.s32 3, %v616
        %v618 = vrot.slane %v476, %v617
        %620 = vbcast.lane.b32.xlu0 %v618, 256
        %v621 = vpop.permute.xlu0 %620
        %v622 = vlaneseq
        %v623 = vshrl.u32 %v622, 7
        %v624 = vsub.s32 4, %v623
        %v625 = vrot.slane %v476, %v624
        %627 = vbcast.lane.b32.xlu0 %v625, 256
        %v628 = vpop.permute.xlu0 %627
        %v629 = vlaneseq
        %v630 = vshrl.u32 %v629, 7
        %v631 = vsub.s32 5, %v630
        %v632 = vrot.slane %v476, %v631
        %634 = vbcast.lane.b32.xlu0 %v632, 256
        %v635 = vpop.permute.xlu0 %634
        %v636 = vlaneseq
        %v637 = vshrl.u32 %v636, 7
        %v638 = vsub.s32 6, %v637
        %v639 = vrot.slane %v476, %v638
        %641 = vbcast.lane.b32.xlu0 %v639, 256
        %v642 = vpop.permute.xlu0 %641
        %v643 = vlaneseq
        %v644 = vshrl.u32 %v643, 7
        %v645 = vsub.s32 7, %v644
        %v646 = vrot.slane %v476, %v645
        %648 = vbcast.lane.b32.xlu0 %v646, 256
        %v649 = vpop.permute.xlu0 %648
        %v650 = vlaneseq
        %v651 = vshrl.u32 %v650, 7
        %v652 = vsub.s32 0, %v651
        %v653 = vrot.slane %v477, %v652
        %655 = vbcast.lane.b32.xlu0 %v653, 256
        %v656 = vpop.permute.xlu0 %655
        %v657 = vlaneseq
        %v658 = vshrl.u32 %v657, 7
        %v659 = vsub.s32 1, %v658
        %v660 = vrot.slane %v477, %v659
        %662 = vbcast.lane.b32.xlu0 %v660, 256
        %v663 = vpop.permute.xlu0 %662
        %v664 = vlaneseq
        %v665 = vshrl.u32 %v664, 7
        %v666 = vsub.s32 2, %v665
        %v667 = vrot.slane %v477, %v666
        %669 = vbcast.lane.b32.xlu0 %v667, 256
        %v670 = vpop.permute.xlu0 %669
        %v671 = vlaneseq
        %v672 = vshrl.u32 %v671, 7
        %v673 = vsub.s32 3, %v672
        %v674 = vrot.slane %v477, %v673
        %676 = vbcast.lane.b32.xlu0 %v674, 256
        %v677 = vpop.permute.xlu0 %676
        %v678 = vlaneseq
        %v679 = vshrl.u32 %v678, 7
        %v680 = vsub.s32 4, %v679
        %v681 = vrot.slane %v477, %v680
        %683 = vbcast.lane.b32.xlu0 %v681, 256
        %v684 = vpop.permute.xlu0 %683
        %v685 = vlaneseq
        %v686 = vshrl.u32 %v685, 7
        %v687 = vsub.s32 5, %v686
        %v688 = vrot.slane %v477, %v687
        %690 = vbcast.lane.b32.xlu0 %v688, 256
        %v691 = vpop.permute.xlu0 %690
        %v692 = vlaneseq
        %v693 = vshrl.u32 %v692, 7
        %v694 = vsub.s32 6, %v693
        %v695 = vrot.slane %v477, %v694
        %697 = vbcast.lane.b32.xlu0 %v695, 256
        %v698 = vpop.permute.xlu0 %697
        %v699 = vlaneseq
        %v700 = vshrl.u32 %v699, 7
        %v701 = vsub.s32 7, %v700
        %v702 = vrot.slane %v477, %v701
        %704 = vbcast.lane.b32.xlu0 %v702, 256
        %v705 = vpop.permute.xlu0 %704
        %v738 = vmul.f32 %v473, %v488
        %v739 = vmul.f32 %v473, %v495
        %v740 = vmul.f32 %v473, %v502
        %v741 = vmul.f32 %v473, %v509
        %v742 = vmul.f32 %v473, %v516
        %v743 = vmul.f32 %v473, %v523
        %v744 = vmul.f32 %v473, %v530
        %v745 = vmul.f32 %v473, %v537
        %v746 = vmul.f32 %v473, %v544
        %v747 = vmul.f32 %v473, %v551
        %v748 = vmul.f32 %v473, %v558
        %v749 = vmul.f32 %v473, %v565
        %v750 = vmul.f32 %v473, %v572
        %v751 = vmul.f32 %v473, %v579
        %v752 = vmul.f32 %v473, %v586
        %v753 = vmul.f32 %v473, %v593
        %v754 = vmul.f32 %v473, %v600
        %v755 = vmul.f32 %v473, %v607
        %v756 = vmul.f32 %v473, %v614
        %v757 = vmul.f32 %v473, %v621
        %v758 = vmul.f32 %v473, %v628
        %v759 = vmul.f32 %v473, %v635
        %v760 = vmul.f32 %v473, %v642
        %v761 = vmul.f32 %v473, %v649
        %v762 = vmul.f32 %v473, %v656
        %v763 = vmul.f32 %v473, %v663
        %v764 = vmul.f32 %v473, %v670
        %v765 = vmul.f32 %v473, %v677
        %v766 = vmul.f32 %v473, %v684
        %v767 = vmul.f32 %v473, %v691
        %v768 = vmul.f32 %v473, %v698
        %v769 = vmul.f32 %v473, %v705
        %802 = vset.pattern.permute.xlu0 0
        %803 = vperm.xlu0 %802, %v738
        %v804 = vpop.permute.xlu0 %803
        %805 = vset.pattern.permute.xlu0 0
        %806 = vperm.xlu0 %805, %v739
        %v807 = vpop.permute.xlu0 %806
        %808 = vset.pattern.permute.xlu0 0
        %809 = vperm.xlu0 %808, %v740
        %v810 = vpop.permute.xlu0 %809
        %811 = vset.pattern.permute.xlu0 0
        %812 = vperm.xlu0 %811, %v741
        %v813 = vpop.permute.xlu0 %812
        %814 = vset.pattern.permute.xlu0 0
        %815 = vperm.xlu0 %814, %v742
        %v816 = vpop.permute.xlu0 %815
        %817 = vset.pattern.permute.xlu0 0
        %818 = vperm.xlu0 %817, %v743
        %v819 = vpop.permute.xlu0 %818
        %820 = vset.pattern.permute.xlu0 0
        %821 = vperm.xlu0 %820, %v744
        %v822 = vpop.permute.xlu0 %821
        %823 = vset.pattern.permute.xlu0 0
        %824 = vperm.xlu0 %823, %v745
        %v825 = vpop.permute.xlu0 %824
        %826 = vset.pattern.permute.xlu0 0
        %827 = vperm.xlu0 %826, %v746
        %v828 = vpop.permute.xlu0 %827
        %829 = vset.pattern.permute.xlu0 0
        %830 = vperm.xlu0 %829, %v747
        %v831 = vpop.permute.xlu0 %830
        %832 = vset.pattern.permute.xlu0 0
        %833 = vperm.xlu0 %832, %v748
        %v834 = vpop.permute.xlu0 %833
        %835 = vset.pattern.permute.xlu0 0
        %836 = vperm.xlu0 %835, %v749
        %v837 = vpop.permute.xlu0 %836
        %838 = vset.pattern.permute.xlu0 0
        %839 = vperm.xlu0 %838, %v750
        %v840 = vpop.permute.xlu0 %839
        %841 = vset.pattern.permute.xlu0 0
        %842 = vperm.xlu0 %841, %v751
        %v843 = vpop.permute.xlu0 %842
        %844 = vset.pattern.permute.xlu0 0
        %845 = vperm.xlu0 %844, %v752
        %v846 = vpop.permute.xlu0 %845
        %847 = vset.pattern.permute.xlu0 0
        %848 = vperm.xlu0 %847, %v753
        %v849 = vpop.permute.xlu0 %848
        %850 = vset.pattern.permute.xlu0 0
        %851 = vperm.xlu0 %850, %v754
        %v852 = vpop.permute.xlu0 %851
        %853 = vset.pattern.permute.xlu0 0
        %854 = vperm.xlu0 %853, %v755
        %v855 = vpop.permute.xlu0 %854
        %856 = vset.pattern.permute.xlu0 0
        %857 = vperm.xlu0 %856, %v756
        %v858 = vpop.permute.xlu0 %857
        %859 = vset.pattern.permute.xlu0 0
        %860 = vperm.xlu0 %859, %v757
        %v861 = vpop.permute.xlu0 %860
        %862 = vset.pattern.permute.xlu0 0
        %863 = vperm.xlu0 %862, %v758
        %v864 = vpop.permute.xlu0 %863
        %865 = vset.pattern.permute.xlu0 0
        %866 = vperm.xlu0 %865, %v759
        %v867 = vpop.permute.xlu0 %866
        %868 = vset.pattern.permute.xlu0 0
        %869 = vperm.xlu0 %868, %v760
        %v870 = vpop.permute.xlu0 %869
        %871 = vset.pattern.permute.xlu0 0
        %872 = vperm.xlu0 %871, %v761
        %v873 = vpop.permute.xlu0 %872
        %874 = vset.pattern.permute.xlu0 0
        %875 = vperm.xlu0 %874, %v762
        %v876 = vpop.permute.xlu0 %875
        %877 = vset.pattern.permute.xlu0 0
        %878 = vperm.xlu0 %877, %v763
        %v879 = vpop.permute.xlu0 %878
        %880 = vset.pattern.permute.xlu0 0
        %881 = vperm.xlu0 %880, %v764
        %v882 = vpop.permute.xlu0 %881
        %883 = vset.pattern.permute.xlu0 0
        %884 = vperm.xlu0 %883, %v765
        %v885 = vpop.permute.xlu0 %884
        %886 = vset.pattern.permute.xlu0 0
        %887 = vperm.xlu0 %886, %v766
        %v888 = vpop.permute.xlu0 %887
        %889 = vset.pattern.permute.xlu0 0
        %890 = vperm.xlu0 %889, %v767
        %v891 = vpop.permute.xlu0 %890
        %892 = vset.pattern.permute.xlu0 0
        %893 = vperm.xlu0 %892, %v768
        %v894 = vpop.permute.xlu0 %893
        %895 = vset.pattern.permute.xlu0 0
        %896 = vperm.xlu0 %895, %v769
        %v897 = vpop.permute.xlu0 %896
        %v898 = vlaneseq
        %v899 = vshrl.u32 %v898, 7
        %v900 = vsub.s32 %v410, %v899
        %v901 = vrot.slane %v804, %v900
        %v902 = vlaneseq
        %v903 = vshrl.u32 %v902, 7
        %v904 = vsub.s32 %v410, %v903
        %v905 = vrot.slane %v807, %v904
        %v906 = vlaneseq
        %v907 = vshrl.u32 %v906, 7
        %v908 = vsub.s32 %v410, %v907
        %v909 = vrot.slane %v810, %v908
        %v910 = vlaneseq
        %v911 = vshrl.u32 %v910, 7
        %v912 = vsub.s32 %v410, %v911
        %v913 = vrot.slane %v813, %v912
        %v914 = vlaneseq
        %v915 = vshrl.u32 %v914, 7
        %v916 = vsub.s32 %v410, %v915
        %v917 = vrot.slane %v816, %v916
        %v918 = vlaneseq
        %v919 = vshrl.u32 %v918, 7
        %v920 = vsub.s32 %v410, %v919
        %v921 = vrot.slane %v819, %v920
        %v922 = vlaneseq
        %v923 = vshrl.u32 %v922, 7
        %v924 = vsub.s32 %v410, %v923
        %v925 = vrot.slane %v822, %v924
        %v926 = vlaneseq
        %v927 = vshrl.u32 %v926, 7
        %v928 = vsub.s32 %v410, %v927
        %v929 = vrot.slane %v825, %v928
        %v930 = vlaneseq
        %v931 = vshrl.u32 %v930, 7
        %v932 = vsub.s32 %v410, %v931
        %v933 = vrot.slane %v828, %v932
        %v934 = vlaneseq
        %v935 = vshrl.u32 %v934, 7
        %v936 = vsub.s32 %v410, %v935
        %v937 = vrot.slane %v831, %v936
        %v938 = vlaneseq
        %v939 = vshrl.u32 %v938, 7
        %v940 = vsub.s32 %v410, %v939
        %v941 = vrot.slane %v834, %v940
        %v942 = vlaneseq
        %v943 = vshrl.u32 %v942, 7
        %v944 = vsub.s32 %v410, %v943
        %v945 = vrot.slane %v837, %v944
        %v946 = vlaneseq
        %v947 = vshrl.u32 %v946, 7
        %v948 = vsub.s32 %v410, %v947
        %v949 = vrot.slane %v840, %v948
        %v950 = vlaneseq
        %v951 = vshrl.u32 %v950, 7
        %v952 = vsub.s32 %v410, %v951
        %v953 = vrot.slane %v843, %v952
        %v954 = vlaneseq
        %v955 = vshrl.u32 %v954, 7
        %v956 = vsub.s32 %v410, %v955
        %v957 = vrot.slane %v846, %v956
        %v958 = vlaneseq
        %v959 = vshrl.u32 %v958, 7
        %v960 = vsub.s32 %v410, %v959
        %v961 = vrot.slane %v849, %v960
        %v962 = vlaneseq
        %v963 = vshrl.u32 %v962, 7
        %v964 = vsub.s32 %v410, %v963
        %v965 = vrot.slane %v852, %v964
        %v966 = vlaneseq
        %v967 = vshrl.u32 %v966, 7
        %v968 = vsub.s32 %v410, %v967
        %v969 = vrot.slane %v855, %v968
        %v970 = vlaneseq
        %v971 = vshrl.u32 %v970, 7
        %v972 = vsub.s32 %v410, %v971
        %v973 = vrot.slane %v858, %v972
        %v974 = vlaneseq
        %v975 = vshrl.u32 %v974, 7
        %v976 = vsub.s32 %v410, %v975
        %v977 = vrot.slane %v861, %v976
        %v978 = vlaneseq
        %v979 = vshrl.u32 %v978, 7
        %v980 = vsub.s32 %v410, %v979
        %v981 = vrot.slane %v864, %v980
        %v982 = vlaneseq
        %v983 = vshrl.u32 %v982, 7
        %v984 = vsub.s32 %v410, %v983
        %v985 = vrot.slane %v867, %v984
        %v986 = vlaneseq
        %v987 = vshrl.u32 %v986, 7
        %v988 = vsub.s32 %v410, %v987
        %v989 = vrot.slane %v870, %v988
        %v990 = vlaneseq
        %v991 = vshrl.u32 %v990, 7
        %v992 = vsub.s32 %v410, %v991
        %v993 = vrot.slane %v873, %v992
        %v994 = vlaneseq
        %v995 = vshrl.u32 %v994, 7
        %v996 = vsub.s32 %v410, %v995
        %v997 = vrot.slane %v876, %v996
        %v998 = vlaneseq
        %v999 = vshrl.u32 %v998, 7
        %v1000 = vsub.s32 %v410, %v999
        %v1001 = vrot.slane %v879, %v1000
        %v1002 = vlaneseq
        %v1003 = vshrl.u32 %v1002, 7
        %v1004 = vsub.s32 %v410, %v1003
        %v1005 = vrot.slane %v882, %v1004
        %v1006 = vlaneseq
        %v1007 = vshrl.u32 %v1006, 7
        %v1008 = vsub.s32 %v410, %v1007
        %v1009 = vrot.slane %v885, %v1008
        %v1010 = vlaneseq
        %v1011 = vshrl.u32 %v1010, 7
        %v1012 = vsub.s32 %v410, %v1011
        %v1013 = vrot.slane %v888, %v1012
        %v1014 = vlaneseq
        %v1015 = vshrl.u32 %v1014, 7
        %v1016 = vsub.s32 %v410, %v1015
        %v1017 = vrot.slane %v891, %v1016
        %v1018 = vlaneseq
        %v1019 = vshrl.u32 %v1018, 7
        %v1020 = vsub.s32 %v410, %v1019
        %v1021 = vrot.slane %v894, %v1020
        %v1022 = vlaneseq
        %v1023 = vshrl.u32 %v1022, 7
        %v1024 = vsub.s32 %v410, %v1023
        %v1025 = vrot.slane %v897, %v1024
        %v1026 = vsel %vm455, %v905, %v901
        %vm1027 = vcmask 1042434
        %v1028 = vsel %vm1027, %v909, %v1026
        %vm1029 = vcmask 1043459
        %v1030 = vsel %vm1029, %v913, %v1028
        %vm1031 = vcmask 1044484
        %v1032 = vsel %vm1031, %v917, %v1030
        %vm1033 = vcmask 1045509
        %v1034 = vsel %vm1033, %v921, %v1032
        %vm1035 = vcmask 1046534
        %v1036 = vsel %vm1035, %v925, %v1034
        %vm1037 = vcmask 1047559
        %v1038 = vsel %vm1037, %v929, %v1036
        %v1039 = vsel %vm455, %v937, %v933
        %v1040 = vsel %vm1027, %v941, %v1039
        %v1041 = vsel %vm1029, %v945, %v1040
        %v1042 = vsel %vm1031, %v949, %v1041
        %v1043 = vsel %vm1033, %v953, %v1042
        %v1044 = vsel %vm1035, %v957, %v1043
        %v1045 = vsel %vm1037, %v961, %v1044
        %v1046 = vsel %vm455, %v969, %v965
        %v1047 = vsel %vm1027, %v973, %v1046
        %v1048 = vsel %vm1029, %v977, %v1047
        %v1049 = vsel %vm1031, %v981, %v1048
        %v1050 = vsel %vm1033, %v985, %v1049
        %v1051 = vsel %vm1035, %v989, %v1050
        %v1052 = vsel %vm1037, %v993, %v1051
        %v1053 = vsel %vm455, %v1001, %v997
        %v1054 = vsel %vm1027, %v1005, %v1053
        %v1055 = vsel %vm1029, %v1009, %v1054
        %v1056 = vsel %vm1031, %v1013, %v1055
        %v1057 = vsel %vm1033, %v1017, %v1056
        %v1058 = vsel %vm1035, %v1021, %v1057
        %v1059 = vsel %vm1037, %v1025, %v1058
        %vm1064 = vcmask 15360
        %v1065 = vsel %vm1064, %v1038, 0.0
        %1066 = vadd.xlane.f32.xlu0 %v1065
        %v1067 = vpop.xlane.xlu0 %1066
        %v1068 = vsel %vm1064, %v1045, 0.0
        %1069 = vadd.xlane.f32.xlu0 %v1068
        %v1070 = vpop.xlane.xlu0 %1069
        %v1071 = vsel %vm1064, %v1052, 0.0
        %1072 = vadd.xlane.f32.xlu0 %v1071
        %v1073 = vpop.xlane.xlu0 %1072
        %v1074 = vsel %vm1064, %v1059, 0.0
        %1075 = vadd.xlane.f32.xlu0 %v1074
        %v1076 = vpop.xlane.xlu0 %1075
        %v1077 = vld [vmem:[%s4] sm:$0x1]
        %v1079 = vlaneseq
        %v1080 = vshrl.u32 %v1079, 7
        %v1081 = vsub.s32 0, %v1080
        %v1082 = vrot.slane %v1077, %v1081
        %1084 = vbcast.lane.b32.xlu0 %v1082, 256
        %v1085 = vpop.permute.xlu0 %1084
        %s1087 = sor.u32 256, 8
        %1088 = vbcast.lane.b32.xlu0 %v1082, %s1087
        %v1089 = vpop.permute.xlu0 %1088
        %s1091 = sor.u32 256, 16
        %1092 = vbcast.lane.b32.xlu0 %v1082, %s1091
        %v1093 = vpop.permute.xlu0 %1092
        %s1095 = sor.u32 256, 24
        %1096 = vbcast.lane.b32.xlu0 %v1082, %s1095
        %v1097 = vpop.permute.xlu0 %1096
        %v1102 = vadd.f32 %v1067, %v1085
        %v1103 = vadd.f32 %v1070, %v1089
        %v1104 = vadd.f32 %v1073, %v1093
        %v1105 = vadd.f32 %v1076, %v1097
        %v1106 = vxor.u32 %v1102, 2147483648
        %v1107 = vxor.u32 %v1103, 2147483648
        %v1108 = vxor.u32 %v1104, 2147483648
        %v1109 = vxor.u32 %v1105, 2147483648
        %v1110 = vmul.f32 %v1106, 1.442695
        %v1111 = vpow.pop %v1110
        %v1112 = vmul.f32 %v1107, 1.442695
        %v1113 = vpow.pop %v1112
        %v1114 = vmul.f32 %v1108, 1.442695
        %v1115 = vpow.pop %v1114
        %v1116 = vmul.f32 %v1109, 1.442695
        %v1117 = vpow.pop %v1116
        %v1118 = vadd.f32 %v1111, 1.0
        %v1119 = vadd.f32 %v1113, 1.0
        %v1120 = vadd.f32 %v1115, 1.0
        %v1121 = vadd.f32 %v1117, 1.0
        %v1122 = vrcp.pop %v1118
        %v1123 = vmul.f32 1.0, %v1122
        %v1124 = vrcp.pop %v1119
        %v1125 = vmul.f32 1.0, %v1124
        %v1126 = vrcp.pop %v1120
        %v1127 = vmul.f32 1.0, %v1126
        %v1128 = vrcp.pop %v1121
        %v1129 = vmul.f32 1.0, %v1128
        %v1130 = vld [vmem:[%s6] sm:$0xff]
        %v1131 = vld [vmem:[%s6 + $0x8] sm:$0xff]
        %1133 = vset.pattern.permute.xlu0 0
        %1134 = vperm.xlu0 %1133, %v1123
        %v1135 = vpop.permute.xlu0 %1134
        %1138 = vset.pattern.permute.xlu0 0
        %1139 = vperm.xlu0 %1138, %v1125
        %v1140 = vpop.permute.xlu0 %1139
        %1143 = vset.pattern.permute.xlu0 0
        %1144 = vperm.xlu0 %1143, %v1127
        %v1145 = vpop.permute.xlu0 %1144
        %1148 = vset.pattern.permute.xlu0 0
        %1149 = vperm.xlu0 %1148, %v1129
        %v1150 = vpop.permute.xlu0 %1149
        %v1152 = vmul.f32 %v297, %v1135
        %v1153 = vmul.f32 %v298, %v1135
        %v1154 = vmul.f32 %v299, %v1140
        %v1155 = vmul.f32 %v300, %v1140
        %v1156 = vmul.f32 %v301, %v1145
        %v1157 = vmul.f32 %v302, %v1145
        %v1158 = vmul.f32 %v303, %v1150
        %v1159 = vmul.f32 %v304, %v1150
        %v1160 = vld [vmem:[%s5] sm:$0xff]
        %v1161 = vld [vmem:[%s5 + $0x8] sm:$0xff]
        %1163 = vset.pattern.permute.xlu0 0
        %1164 = vperm.xlu0 %1163, %v1130
        %v1165 = vpop.permute.xlu0 %1164
        %1168 = vset.pattern.permute.xlu0 0
        %1169 = vperm.xlu0 %1168, %v1131
        %v1170 = vpop.permute.xlu0 %1169
        %vm1172 = vcmask 261120
        %v1174 = vsel %vm1172, %v1160, 0
        %v1177 = vsel %vm1172, %v1161, 0
        %1179 = vmatprep.subr.mxu0 %v1153
        %1180 = vmatpush1.msra.mxu0 %v1152
        %1181 = vmatprep.subr.mxu0 %v1155
        %1182 = vmatpush1.msra.mxu0 %v1154
        %1183 = vmatprep.subr.mxu0 %v1157
        %1184 = vmatpush1.msra.mxu0 %v1156
        %1185 = vmatprep.subr.mxu0 %v1159
        %1186 = vmatpush1.msra.mxu0 %v1158
        %1187 = vmatprep.subr.mxu0 0.0
        %1188 = vmatpush1.msra.mxu0 0.0
        %1189 = vmatprep.subr.mxu0 0.0
        %1190 = vmatpush1.msra.mxu0 0.0
        %1191 = vmatprep.subr.mxu0 0.0
        %1192 = vmatpush1.msra.mxu0 0.0
        %1193 = vmatprep.subr.mxu0 0.0
        %1194 = vmatpush1.msra.mxu0 0.0
        %1195 = vmatprep.subr.mxu0 0.0
        %1196 = vmatpush1.msra.mxu0 0.0
        %1197 = vmatprep.subr.mxu0 0.0
        %1198 = vmatpush1.msra.mxu0 0.0
        %1199 = vmatprep.subr.mxu0 0.0
        %1200 = vmatpush1.msra.mxu0 0.0
        %1201 = vmatprep.subr.mxu0 0.0
        %1202 = vmatpush1.msra.mxu0 0.0
        %1203 = vmatprep.subr.mxu0 0.0
        %1204 = vmatpush1.msra.mxu0 0.0
        %1205 = vmatprep.subr.mxu0 0.0
        %1206 = vmatpush1.msra.mxu0 0.0
        %1207 = vmatprep.subr.mxu0 0.0
        %1208 = vmatpush1.msra.mxu0 0.0
        %1209 = vmatprep.subr.mxu0 0.0
        %1210 = vmatpush1.msra.mxu0 0.0
        %1211 = vmatprep.subr.mxu0 0.0
        %1212 = vmatpush1.msra.mxu0 0.0
        %1213 = vmatprep.subr.mxu0 0.0
        %1214 = vmatpush1.msra.mxu0 0.0
        %1215 = vmatprep.subr.mxu0 0.0
        %1216 = vmatpush1.msra.mxu0 0.0
        %1217 = vmatprep.subr.mxu0 0.0
        %1218 = vmatpush1.msra.mxu0 0.0
        %1219 = vmatprep.subr.mxu0 0.0
        %1220 = vmatpush1.msra.mxu0 0.0
        %1221 = vmatprep.subr.mxu0 0.0
        %1222 = vmatpush1.msra.mxu0 0.0
        %1223 = vmatprep.subr.mxu0 0.0
        %1224 = vmatpush1.msra.mxu0 0.0
        %1225 = vmatprep.subr.mxu0 0.0
        %1226 = vmatpush1.msra.mxu0 0.0
        %1227 = vmatprep.subr.mxu0 0.0
        %1228 = vmatpush1.msra.mxu0 0.0
        %1229 = vmatprep.subr.mxu0 0.0
        %1230 = vmatpush1.msra.mxu0 0.0
        %1231 = vmatprep.subr.mxu0 0.0
        %1232 = vmatpush1.msra.mxu0 0.0
        %1233 = vmatprep.subr.mxu0 0.0
        %1234 = vmatpush1.msra.mxu0 0.0
        %1235 = vmatprep.subr.mxu0 0.0
        %1236 = vmatpush1.msra.mxu0 0.0
        %1237 = vmatprep.subr.mxu0 0.0
        %1238 = vmatpush1.msra.mxu0 0.0
        %1239 = vmatprep.subr.mxu0 0.0
        %1240 = vmatpush1.msra.mxu0 0.0
        %1241 = vmatprep.subr.mxu0 0.0
        %1242 = vmatpush1.msra.mxu0 0.0
        %1243 = vmatprep.mubr.f32.mxu0 0.0
        %1244 = vmatmul.mubr.f32.gmra.mrb[0].mxu0 %v1174
        %v1245 = vpop.f32.mrb[0].mxu0
        %v1246 = vadd.f32 %v1165, %v1245
        %v1247 = vpop.f32.mrb[0].mxu0
        %v1248 = vadd.f32 %v1165, %v1247
        %1249 = vmatprep.mubr.f32.mxu0 0.0
        %1250 = vmatmul.mubr.f32.gmra.mrb[0].mxu0 %v1177
        %v1251 = vpop.f32.mrb[0].mxu0
        %v1252 = vadd.f32 %v1170, %v1251
        %v1253 = vpop.f32.mrb[0].mxu0
        %v1254 = vadd.f32 %v1170, %v1253
        %1255 = vdwg.mxu0
        %v1256 = vmul.f32 %v1246, 0.5
        %v1257 = vmul.f32 %v1248, 0.5
        %v1258 = vmul.f32 %v1252, 0.5
        %v1259 = vmul.f32 %v1254, 0.5
        %v1260 = vmul.f32 %v1246, 0.70710677
        %v1261 = vmul.f32 %v1248, 0.70710677
        %v1262 = vmul.f32 %v1252, 0.70710677
        %v1263 = vmul.f32 %v1254, 0.70710677
        %v1264 = verf.f32.pop %v1260
        %v1265 = verf.f32.pop %v1261
        %v1266 = verf.f32.pop %v1262
        %v1267 = verf.f32.pop %v1263
        %v1268 = vadd.f32 %v1264, 1.0
        %v1269 = vadd.f32 %v1265, 1.0
        %v1270 = vadd.f32 %v1266, 1.0
        %v1271 = vadd.f32 %v1267, 1.0
        %v1272 = vmul.f32 %v1256, %v1268
        %v1273 = vmul.f32 %v1257, %v1269
        %v1274 = vmul.f32 %v1258, %v1270
        %v1275 = vmul.f32 %v1259, %v1271
        %1276 = vst [vmem:[%s296] sm:$0xff] %v1272
        %1277 = vst [vmem:[%s296 + $0x8] sm:$0xff] %v1273
        %1278 = vst [vmem:[%s296 + $0x10] sm:$0xff] %v1274
        %1279 = vst [vmem:[%s296 + $0x18] sm:$0xff] %v1275
        %s1280 = sand.u32 %s184, 1
        %s1281 = scalar_lea.sflag [#allocation4], %s1280
        %s1282 = sand.u32 %s184, 1
        %s1283 = smul.addr %s1282, 32
        %s1284 = scalar_lea.vmem [#allocation5], %s1283
        // Predicated region
        $region53: #{tpu_custom_call.1} parent=47 // pred_check
          %p1285 = pneg %p194
        $region54: #{tpu_custom_call.1} parent=47 // pred_check_branch
          %1287 = sbr.rel (%p1285) target = $region56
        $region55: #{tpu_custom_call.1} parent=47 // pred_region
          %s1289 = ssub.s32 512, 512
          %1290 = vsyncadd %s1281, %s1289
          %s1291 = smul.addr %s24, 4
          %s1292 = smul.addr %s1291, 128
          %s1293 = scalar_lea.hbm %s7, %s1292
          %s1294 = sshll.u32 %s1284, 4
          %s1295 = int_to_ptr.vmem [resolvable:$true] %s1294
          %1300 = dma.vmem_to_hbm [thread:$0]  %s1295, 512, %s1293, %s1281, 256, 256, 16
        $region56: #{tpu_custom_call.1} parent=47 // pred_fallthru
          _
      $region48: #{tpu_custom_call.1} parent=5 // pred_fallthru
        _
      %p1301 = scmp.le.s32.totalorder 2, %s19
      // Predicated region
      $region57: #{tpu_custom_call.1} parent=5 // pred_check
        %p1302 = pneg %p1301
      $region58: #{tpu_custom_call.1} parent=5 // pred_check_branch
        %1304 = sbr.rel (%p1302) target = $region60
      $region59: #{tpu_custom_call.1} parent=5 // pred_region
        %s1305 = ssub.s32 %s19, 2
        // Predicated region
        $region61: #{tpu_custom_call.1} parent=59 // pred_check
          %p1306 = pneg %p200
        $region62: #{tpu_custom_call.1} parent=59 // pred_check_branch
          %1308 = sbr.rel (%p1306) target = $region64
        $region63: #{tpu_custom_call.1} parent=59 // pred_region
          %s1309 = sand.u32 %s185, 1
          %s1310 = scalar_lea.sflag [#allocation4], %s1309
          %s1311 = sand.u32 %s185, 1
          %s1312 = smul.addr %s1311, 32
          %s1313 = scalar_lea.vmem [#allocation5], %s1312
          %1314 = dma.done %s1310, 512
        $region64: #{tpu_custom_call.1} parent=59 // pred_fallthru
          _
      $region60: #{tpu_custom_call.1} parent=5 // pred_fallthru
        _
    $region6: #{tpu_custom_call.1} parent=1 // loop_footer
      %s23 = sadd.s32 1, %s19
    $region7: #{tpu_custom_call.1} parent=1 // loop_footer_branch
      %18 = sbr.rel target = $region3
    $region8: #{tpu_custom_call.1} parent=1 // loop_exit
      _
    %1315 = vsyncpa [#allocation3], 1
    %s1316 = scalar_lea.sflag [#allocation3], 1
    %1317 = vsyncpa %s1316, 1
    %1318 = vsyncpa [#allocation4], 1
    %s1319 = scalar_lea.sflag [#allocation4], 1
    %1320 = vsyncpa %s1319, 1

</llo_original>
